<compile_context>
chip_gen: v6e
topology: v6e:2x2x1
jax: 0.10.0
libtpu: 0.0.40
codegen_flags: <defaults>
</compile_context>

<pallas_src>
import numpy as np
import jax
import jax.numpy as jnp
from jax.experimental import pallas as pl
from jax.experimental.pallas import tpu as pltpu


_IMAGENET_MEAN = (0.485, 0.456, 0.406)
_IMAGENET_STD = (0.229, 0.224, 0.225)


def _bilinear_matrix(in_size, out_size):
    """Interpolation matrix matching torch bilinear upsample (align_corners=False,
    no antialias): row i holds the weights over input pixels for output pixel i."""
    scale = in_size / out_size
    i = np.arange(out_size, dtype=np.float64)
    src = np.maximum((i + 0.5) * scale - 0.5, 0.0)        # torch clamps negative src to 0
    i0 = np.clip(np.floor(src).astype(np.int64), 0, in_size - 1)
    i1 = np.minimum(i0 + 1, in_size - 1)
    frac = (src - i0).astype(np.float32)
    Wm = np.zeros((out_size, in_size), dtype=np.float32)
    rows = np.arange(out_size)
    np.add.at(Wm, (rows, i0), 1.0 - frac)
    np.add.at(Wm, (rows, i1), frac)
    return Wm


def _oh_tiles_for_device(OH):
    """2 output-row tiles only where there are 2 TensorCores per chip (v7x).
    Single-TC chips (v5e/v6e) get a single grid step: no duplicated width matmul,
    no extra grid-step overhead."""
    try:
        kind = jax.devices()[0].device_kind.lower()
    except Exception:
        kind = ""
    tiles = 2 if ("v7" in kind or "7x" in kind) else 1
    if OH % tiles != 0 or (OH // tiles) % 8 != 0:
        tiles = 1
    return tiles


def preprocessing_pipeline_binary(image_hwc, labels, output_size=(224, 224),
                                  normalize=False):
    H, W, C = image_hwc.shape
    OH, OW = output_size
    pad_tb = 84  # transforms.Pad((0, 84)): left/right = 0, top/bottom = 84, fill = 0

    compute_dtype = jnp.bfloat16

    # Height interpolation with the zero Pad((0, 84)) folded in exactly:
    # padded rows are zero, so their weight columns are simply dropped.
    wh_full = _bilinear_matrix(H + 2 * pad_tb, OH)                         # (OH, H+168)
    wh_eff = jnp.asarray(np.ascontiguousarray(wh_full[:, pad_tb:pad_tb + H]),
                         dtype=compute_dtype)                              # (OH, H)

    # Width interpolation matrix, shared across channels. When normalizing, fold the
    # per-channel 1/std scale in here (only the additive shift stays in-kernel).
    wwt_np = _bilinear_matrix(W, OW).T                                     # (W, OW)
    if normalize:
        mean = np.asarray(_IMAGENET_MEAN[:C], dtype=np.float32)
        std = np.asarray(_IMAGENET_STD[:C], dtype=np.float32)
        shift_c = [float(-mean[c] / std[c]) for c in range(C)]
        ww = jnp.asarray(np.stack([wwt_np / std[c] for c in range(C)]),
                         dtype=compute_dtype)                              # (C, W, OW)
    else:
        shift_c = None
        ww = jnp.asarray(wwt_np, dtype=compute_dtype)                      # (W, OW)

    oh_tiles = _oh_tiles_for_device(OH)
    TOH = OH // oh_tiles

    # glue: HWC -> CHW (tiny XLA transpose). uint8 stays uint8 through the DMA and is
    # cast in-kernel; everything else is cast to bf16 once here (halves input DMA).
    img_chw = jnp.transpose(jnp.asarray(image_hwc), (2, 0, 1))             # (C, H, W)
    if img_chw.dtype != jnp.uint8:
        img_chw = img_chw.astype(compute_dtype)

    def kernel(img_ref, wh_ref, ww_ref, out_ref):
        wh = wh_ref[...]                                     # (TOH, H) bf16
        for c in range(C):                                   # static unroll, C is tiny
            x = img_ref[c].astype(compute_dtype)             # (H, W)
            wwc = ww_ref[c] if normalize else ww_ref[...]    # (W, OW)
            # width-first: lane-dense (H, OW) intermediate, f32 MXU accumulation
            tmp = jnp.dot(x, wwc, preferred_element_type=jnp.float32)      # (H, OW)
            res = jnp.dot(wh, tmp.astype(compute_dtype),
                          preferred_element_type=jnp.float32)              # (TOH, OW)
            if normalize:
                res = res + shift_c[c]                       # scale already in wwc
            out_ref[c] = res.astype(out_ref.dtype)

    if normalize:
        ww_spec = pl.BlockSpec((C, W, OW), lambda i: (0, 0, 0))
    else:
        ww_spec = pl.BlockSpec((W, OW), lambda i: (0, 0))

    flops = oh_tiles * C * 2.0 * (H * W * OW + TOH * H * OW)
    bytes_accessed = (img_chw.dtype.itemsize * img_chw.size
                      + wh_eff.dtype.itemsize * wh_eff.size
                      + ww.dtype.itemsize * ww.size
                      + 4.0 * C * OH * OW)

    out = pl.pallas_call(
        kernel,
        out_shape=jax.ShapeDtypeStruct((C, OH, OW), jnp.float32),
        grid=(oh_tiles,),
        in_specs=[
            pl.BlockSpec((C, H, W), lambda i: (0, 0, 0)),    # full image, fetched once
            pl.BlockSpec((TOH, H), lambda i: (i, 0)),        # height weights, row-tiled
            ww_spec,                                         # shared width weights
        ],
        out_specs=pl.BlockSpec((C, TOH, OW), lambda i: (0, i, 0)),
        compiler_params=pltpu.CompilerParams(
            dimension_semantics=("parallel",)),
        cost_estimate=pl.CostEstimate(flops=int(flops), transcendentals=0,
                                      bytes_accessed=int(bytes_accessed)),
    )(img_chw, wh_eff, ww)

    # glue: labels -> float32, unsqueeze(-1)
    labels_out = jnp.asarray(labels, dtype=jnp.float32)[..., None]
    return out, labels_out


if __name__ == "__main__":
    key = jax.random.PRNGKey(0)
    # Small HWC image consistent with the module's forward (permute(2,0,1) expects HWC).
    image = jax.random.uniform(key, (16, 16, 3), dtype=jnp.float32)
    labels = 1.0  # binary label scalar

    img_out, lbl_out = preprocessing_pipeline_binary(image, labels,
                                                     output_size=(224, 224),
                                                     normalize=False)
    jax.block_until_ready(img_out)
    jax.block_until_ready(lbl_out)

    assert img_out.shape == (3, 224, 224) and img_out.dtype == jnp.float32
    assert lbl_out.shape == (1,) and lbl_out.dtype == jnp.float32

    # Reference: same math (pad folded into the height matrix) done densely in numpy.
    img_np = np.asarray(image, dtype=np.float32)
    wh_ref = _bilinear_matrix(16 + 2 * 84, 224)[:, 84:84 + 16]
    ww_ref = _bilinear_matrix(16, 224)
    ref = np.stack([wh_ref @ img_np[:, :, c] @ ww_ref.T for c in range(3)])
    assert np.allclose(np.asarray(img_out), ref, atol=2e-2, rtol=2e-2)

    # Exercise the normalize path (scale folded into the bf16 width weights).
    img_out_n, _ = preprocessing_pipeline_binary(image, labels,
                                                 output_size=(224, 224),
                                                 normalize=True)
    jax.block_until_ready(img_out_n)
    mean = np.array(_IMAGENET_MEAN, dtype=np.float32).reshape(3, 1, 1)
    std = np.array(_IMAGENET_STD, dtype=np.float32).reshape(3, 1, 1)
    ref_n = (ref - mean) / std
    assert np.allclose(np.asarray(img_out_n), ref_n, atol=5e-2, rtol=5e-2)

    print("KERNEL_OK")
</pallas_src>

<mosaic_0001>
module attributes {stable_mosaic.version = 11 : i64} {
  func.func @kernel(%arg0: i32, %arg1: memref<3x16x16xbf16, #tpu.memory_space<vmem>>, %arg2: memref<224x16xbf16, #tpu.memory_space<vmem>>, %arg3: memref<16x224xbf16, #tpu.memory_space<vmem>>, %arg4: memref<3x224x224xf32, #tpu.memory_space<vmem>>) attributes {dimension_semantics = [#tpu.dimension_semantics<parallel>], iteration_bounds = array<i64: 1>, scalar_prefetch = 0 : i64, scratch_operands = 0 : i64, tpu.core_type = #tpu.core_type<tc>, window_params = [{pipeline_mode = #tpu.pipeline_mode<synchronous>, transform_indices = @transform_0, window_bounds = array<i64: 3, 16, 16>}, {transform_indices = @transform_1, window_bounds = array<i64: 224, 16>}, {pipeline_mode = #tpu.pipeline_mode<synchronous>, transform_indices = @transform_2, window_bounds = array<i64: 16, 224>}, {transform_indices = @transform_3, window_bounds = array<i64: 3, 224, 224>}]} {
    %c0 = arith.constant 0 : index
    %c0_0 = arith.constant 0 : index
    %0 = vector.load %arg2[%c0, %c0_0] : memref<224x16xbf16, #tpu.memory_space<vmem>>, vector<224x16xbf16>
    %c0_1 = arith.constant 0 : index
    %c0_2 = arith.constant 0 : index
    %c0_3 = arith.constant 0 : index
    %1 = vector.load %arg1[%c0_1, %c0_2, %c0_3] : memref<3x16x16xbf16, #tpu.memory_space<vmem>>, vector<1x16x16xbf16>
    %2 = vector.shape_cast %1 : vector<1x16x16xbf16> to vector<16x16xbf16>
    %c0_4 = arith.constant 0 : index
    %c0_5 = arith.constant 0 : index
    %3 = vector.load %arg3[%c0_4, %c0_5] : memref<16x224xbf16, #tpu.memory_space<vmem>>, vector<16x224xbf16>
    %cst = arith.constant dense<0.000000e+00> : vector<16x224xf32>
    %4 = tpu.matmul %2, %3, %cst {dimension_numbers = #tpu.dot_dimension_numbers<[1], [0], [0], [1], [0, 0, 1, 1], [], []>} : vector<16x16xbf16>, vector<16x224xbf16>, vector<16x224xf32> -> vector<16x224xf32>
    %5 = arith.truncf %4 : vector<16x224xf32> to vector<16x224xbf16>
    %cst_6 = arith.constant dense<0.000000e+00> : vector<224x224xf32>
    %6 = tpu.matmul %0, %5, %cst_6 {dimension_numbers = #tpu.dot_dimension_numbers<[1], [0], [0], [1], [0, 0, 1, 1], [], []>} : vector<224x16xbf16>, vector<16x224xbf16>, vector<224x224xf32> -> vector<224x224xf32>
    %c0_7 = arith.constant 0 : index
    %c0_8 = arith.constant 0 : index
    %c0_9 = arith.constant 0 : index
    %7 = vector.load %arg4[%c0_7, %c0_8, %c0_9] : memref<3x224x224xf32, #tpu.memory_space<vmem>>, vector<1x224x224xf32>
    %8 = vector.shape_cast %7 : vector<1x224x224xf32> to vector<224x224xf32>
    %9 = vector.shape_cast %6 : vector<224x224xf32> to vector<1x224x224xf32>
    tpu.vector_store %arg4[%c0_7, %c0_8, %c0_9], %9 {strides = array<i32>} : memref<3x224x224xf32, #tpu.memory_space<vmem>>, vector<1x224x224xf32>,
    %c1 = arith.constant 1 : index
    %c0_10 = arith.constant 0 : index
    %c0_11 = arith.constant 0 : index
    %10 = vector.load %arg1[%c1, %c0_10, %c0_11] : memref<3x16x16xbf16, #tpu.memory_space<vmem>>, vector<1x16x16xbf16>
    %11 = vector.shape_cast %10 : vector<1x16x16xbf16> to vector<16x16xbf16>
    %c0_12 = arith.constant 0 : index
    %c0_13 = arith.constant 0 : index
    %12 = vector.load %arg3[%c0_12, %c0_13] : memref<16x224xbf16, #tpu.memory_space<vmem>>, vector<16x224xbf16>
    %cst_14 = arith.constant dense<0.000000e+00> : vector<16x224xf32>
    %13 = tpu.matmul %11, %12, %cst_14 {dimension_numbers = #tpu.dot_dimension_numbers<[1], [0], [0], [1], [0, 0, 1, 1], [], []>} : vector<16x16xbf16>, vector<16x224xbf16>, vector<16x224xf32> -> vector<16x224xf32>
    %14 = arith.truncf %13 : vector<16x224xf32> to vector<16x224xbf16>
    %cst_15 = arith.constant dense<0.000000e+00> : vector<224x224xf32>
    %15 = tpu.matmul %0, %14, %cst_15 {dimension_numbers = #tpu.dot_dimension_numbers<[1], [0], [0], [1], [0, 0, 1, 1], [], []>} : vector<224x16xbf16>, vector<16x224xbf16>, vector<224x224xf32> -> vector<224x224xf32>
    %c1_16 = arith.constant 1 : index
    %c0_17 = arith.constant 0 : index
    %c0_18 = arith.constant 0 : index
    %16 = vector.load %arg4[%c1_16, %c0_17, %c0_18] : memref<3x224x224xf32, #tpu.memory_space<vmem>>, vector<1x224x224xf32>
    %17 = vector.shape_cast %16 : vector<1x224x224xf32> to vector<224x224xf32>
    %18 = vector.shape_cast %15 : vector<224x224xf32> to vector<1x224x224xf32>
    tpu.vector_store %arg4[%c1_16, %c0_17, %c0_18], %18 {strides = array<i32>} : memref<3x224x224xf32, #tpu.memory_space<vmem>>, vector<1x224x224xf32>,
    %c2 = arith.constant 2 : index
    %c0_19 = arith.constant 0 : index
    %c0_20 = arith.constant 0 : index
    %19 = vector.load %arg1[%c2, %c0_19, %c0_20] : memref<3x16x16xbf16, #tpu.memory_space<vmem>>, vector<1x16x16xbf16>
    %20 = vector.shape_cast %19 : vector<1x16x16xbf16> to vector<16x16xbf16>
    %c0_21 = arith.constant 0 : index
    %c0_22 = arith.constant 0 : index
    %21 = vector.load %arg3[%c0_21, %c0_22] : memref<16x224xbf16, #tpu.memory_space<vmem>>, vector<16x224xbf16>
    %cst_23 = arith.constant dense<0.000000e+00> : vector<16x224xf32>
    %22 = tpu.matmul %20, %21, %cst_23 {dimension_numbers = #tpu.dot_dimension_numbers<[1], [0], [0], [1], [0, 0, 1, 1], [], []>} : vector<16x16xbf16>, vector<16x224xbf16>, vector<16x224xf32> -> vector<16x224xf32>
    %23 = arith.truncf %22 : vector<16x224xf32> to vector<16x224xbf16>
    %cst_24 = arith.constant dense<0.000000e+00> : vector<224x224xf32>
    %24 = tpu.matmul %0, %23, %cst_24 {dimension_numbers = #tpu.dot_dimension_numbers<[1], [0], [0], [1], [0, 0, 1, 1], [], []>} : vector<224x16xbf16>, vector<16x224xbf16>, vector<224x224xf32> -> vector<224x224xf32>
    %c2_25 = arith.constant 2 : index
    %c0_26 = arith.constant 0 : index
    %c0_27 = arith.constant 0 : index
    %25 = vector.load %arg4[%c2_25, %c0_26, %c0_27] : memref<3x224x224xf32, #tpu.memory_space<vmem>>, vector<1x224x224xf32>
    %26 = vector.shape_cast %25 : vector<1x224x224xf32> to vector<224x224xf32>
    %27 = vector.shape_cast %24 : vector<224x224xf32> to vector<1x224x224xf32>
    tpu.vector_store %arg4[%c2_25, %c0_26, %c0_27], %27 {strides = array<i32>} : memref<3x224x224xf32, #tpu.memory_space<vmem>>, vector<1x224x224xf32>,
    return
  }
  func.func @transform_0(%arg0: i32) -> (i32, i32, i32) {
    %c0_i32 = arith.constant 0 : i32
    %c0_i32_0 = arith.constant 0 : i32
    %c0_i32_1 = arith.constant 0 : i32
    %c0_i32_2 = arith.constant 0 : i32
    return %c0_i32, %c0_i32_0, %c0_i32_1 : i32, i32, i32
  }
  func.func @transform_1(%arg0: i32) -> (i32, i32) {
    %c0_i32 = arith.constant 0 : i32
    %c0_i32_0 = arith.constant 0 : i32
    return %arg0, %c0_i32 : i32, i32
  }
  func.func @transform_2(%arg0: i32) -> (i32, i32) {
    %c0_i32 = arith.constant 0 : i32
    %c0_i32_0 = arith.constant 0 : i32
    %c0_i32_1 = arith.constant 0 : i32
    return %c0_i32, %c0_i32_0 : i32, i32
  }
  func.func @transform_3(%arg0: i32) -> (i32, i32, i32) {
    %c0_i32 = arith.constant 0 : i32
    %c0_i32_0 = arith.constant 0 : i32
    %c0_i32_1 = arith.constant 0 : i32
    return %c0_i32, %arg0, %c0_i32_0 : i32, i32, i32
  }
}

</mosaic_0001>

<llo_original>
// kernel: tpu_custom_call.1
$region0: #{tpu_custom_call.1}
  #allocation0 [shape = 'u32[]', space=smem, size = 0x4, offset = 0x4, fixed_abs, tag = 'smem constant byte address 0x4 - core index']
  #allocation1 [shape = 'u32[144,128]{1,0:T(1,128)}', space=vmem, size = 0x12000, scoped, tag = 'internal scratch']
  %s0 = inlined_call_operand.vmem [shape: bf16[3,16,16], index: 0, kind: input, shape index: {}]
  %s1 = inlined_call_operand.vmem [shape: bf16[224,16], index: 1, kind: input, shape index: {}]
  %s2 = inlined_call_operand.vmem [shape: bf16[16,224], index: 2, kind: input, shape index: {}]
  %s3 = inlined_call_operand.hbm [shape: f32[3,224,224], index: 3, kind: output, shape index: {}]
  %s4 = sld [smem:[#allocation0]]
  $region22: #{tpu_custom_call.1} parent=0
    _
  %s6 = ssub.s32 1, %s4
  %s7 = scalar_select 0, %s6, %s4
  $region1: #{tpu_custom_call.1} parent=0
    #allocation2 [shape = 'u8[688128]{0}', space=vmem, size = 0xa8000, scoped, tag = 'output window, operand 0, single buffered']
    #allocation3 [shape = 's32[1]{0}', space=sflag, size = 0x4, scoped, tag = 'scoped memory for tpu_custom_call.1']
    %8 = vsyncpa [#allocation3], 0
    // Predicated region
    $region2: #{tpu_custom_call.1} parent=1 // pred_check
      _
    $region3: #{tpu_custom_call.1} parent=1 // pred_check_branch
      %10 = sbr.rel (0) target = $region5
    $region4: #{tpu_custom_call.1} parent=1 // pred_region
      _
    $region5: #{tpu_custom_call.1} parent=1 // pred_fallthru
      _
    // Predicated region
    $region6: #{tpu_custom_call.1} parent=1 // pred_check
      _
    $region7: #{tpu_custom_call.1} parent=1 // pred_check_branch
      %12 = sbr.rel (0) target = $region9
    $region8: #{tpu_custom_call.1} parent=1 // pred_region
      _
    $region9: #{tpu_custom_call.1} parent=1 // pred_fallthru
      _
    // Predicated region
    $region10: #{tpu_custom_call.1} parent=1 // pred_check
      _
    $region11: #{tpu_custom_call.1} parent=1 // pred_check_branch
      %14 = sbr.rel (0) target = $region13
    $region12: #{tpu_custom_call.1} parent=1 // pred_region
      _
    $region13: #{tpu_custom_call.1} parent=1 // pred_fallthru
      _
    %v16 = vld [vmem:[%s1] sm:$0xf]
    %v17 = vld [vmem:[%s1 + $0x4] sm:$0xf]
    %v18 = vld [vmem:[%s1 + $0x8] sm:$0xf]
    %v19 = vld [vmem:[%s1 + $0xc] sm:$0xf]
    %v20 = vld [vmem:[%s1 + $0x10] sm:$0xf]
    %v21 = vld [vmem:[%s1 + $0x14] sm:$0xf]
    %v22 = vld [vmem:[%s1 + $0x18] sm:$0xf]
    %v23 = vld [vmem:[%s1 + $0x1c] sm:$0xf]
    %v24 = vld [vmem:[%s1 + $0x20] sm:$0xf]
    %v25 = vld [vmem:[%s1 + $0x24] sm:$0xf]
    %v26 = vld [vmem:[%s1 + $0x28] sm:$0xf]
    %v27 = vld [vmem:[%s1 + $0x2c] sm:$0xf]
    %v28 = vld [vmem:[%s1 + $0x30] sm:$0xf]
    %v29 = vld [vmem:[%s1 + $0x34] sm:$0xf]
    %v30 = vld [vmem:[%s1 + $0x38] sm:$0xf]
    %v31 = vld [vmem:[%s1 + $0x3c] sm:$0xf]
    %v32 = vld [vmem:[%s1 + $0x40] sm:$0xf]
    %v33 = vld [vmem:[%s1 + $0x44] sm:$0xf]
    %v34 = vld [vmem:[%s1 + $0x48] sm:$0xf]
    %v35 = vld [vmem:[%s1 + $0x4c] sm:$0xf]
    %v36 = vld [vmem:[%s1 + $0x50] sm:$0xf]
    %v37 = vld [vmem:[%s1 + $0x54] sm:$0xf]
    %v38 = vld [vmem:[%s1 + $0x58] sm:$0xf]
    %v39 = vld [vmem:[%s1 + $0x5c] sm:$0xf]
    %v40 = vld [vmem:[%s1 + $0x60] sm:$0xf]
    %v41 = vld [vmem:[%s1 + $0x64] sm:$0xf]
    %v42 = vld [vmem:[%s1 + $0x68] sm:$0xf]
    %v43 = vld [vmem:[%s1 + $0x6c] sm:$0xf]
    %v44 = vld [vmem:[%s0] sm:$0xf]
    %v45 = vld [vmem:[%s0 + $0x4] sm:$0xf]
    %v46 = vld [vmem:[%s2] sm:$0xff]
    %v47 = vld [vmem:[%s2 + $0x8] sm:$0xff]
    %v50 = vunpack.c.l.b16 %v44
    %v51 = vunpack.c.l.b16 %v45
    %v52 = vpack.c.b16 %v51, %v50
    %v55 = vunpack.c.l.b16 %v46
    %v56 = vunpack.c.h.b16 %v46
    %v57 = vunpack.c.l.b16 %v47
    %v58 = vunpack.c.h.b16 %v47
    %v59 = vpack.c.b16 %v57, %v55
    %v60 = vpack.c.b16 %v58, %v56
    %vm63 = vcmask 130048
    %v65 = vsel %vm63, %v52, 0
    %67 = vmatprep.subr.bf16.mxu0 0
    %68 = vmatpush1.bf16.msra.mxu0 0
    %69 = vmatprep.subr.bf16.mxu0 0
    %70 = vmatpush1.bf16.msra.mxu0 0
    %71 = vmatprep.subr.bf16.mxu0 0
    %72 = vmatpush1.bf16.msra.mxu0 0
    %73 = vmatprep.subr.bf16.mxu0 0
    %74 = vmatpush1.bf16.msra.mxu0 0
    %75 = vmatprep.subr.bf16.mxu0 0
    %76 = vmatpush1.bf16.msra.mxu0 0
    %77 = vmatprep.subr.bf16.mxu0 0
    %78 = vmatpush1.bf16.msra.mxu0 0
    %79 = vmatprep.subr.bf16.mxu0 0
    %80 = vmatpush1.bf16.msra.mxu0 0
    %81 = vmatprep.subr.bf16.mxu0 %v60
    %82 = vmatpush1.bf16.msra.mxu0 %v59
    %83 = vmatprep.subr.bf16.mxu0 0
    %84 = vmatpush2.bf16.msra.mxu0 0
    %85 = vmatprep.subr.bf16.mxu0 0
    %86 = vmatpush2.bf16.msra.mxu0 0
    %87 = vmatprep.subr.bf16.mxu0 0
    %88 = vmatpush2.bf16.msra.mxu0 0
    %89 = vmatprep.subr.bf16.mxu0 0
    %90 = vmatpush2.bf16.msra.mxu0 0
    %91 = vmatprep.subr.bf16.mxu0 0
    %92 = vmatpush2.bf16.msra.mxu0 0
    %93 = vmatprep.subr.bf16.mxu0 0
    %94 = vmatpush2.bf16.msra.mxu0 0
    %95 = vmatprep.subr.bf16.mxu0 0
    %96 = vmatpush2.bf16.msra.mxu0 0
    %97 = vmatprep.subr.bf16.mxu0 0
    %98 = vmatpush2.bf16.msra.mxu0 0
    %99 = vmatprep.mubr.bf16.mxu0 0
    %100 = vmatmul.mubr.bf16.gmra.mxu0 %v65
    %v101 = vpop.f32.mrf.mxu0
    %v102 = vadd.f32 0.0, %v101
    %v103 = vpop.f32.mrf.mxu0
    %v104 = vadd.f32 0.0, %v103
    %v105 = vpop.f32.mrf.mxu0
    %v106 = vadd.f32 0.0, %v105
    %v107 = vpop.f32.mrf.mxu0
    %v108 = vadd.f32 0.0, %v107
    %109 = vdwg.mxu0
    %v110 = vpack.c.bf16 %v106, %v102
    %v111 = vpack.c.bf16 %v108, %v104
    %v140 = vunpack.c.l.b16 %v16
    %v141 = vunpack.c.l.b16 %v17
    %v142 = vunpack.c.l.b16 %v18
    %v143 = vunpack.c.l.b16 %v19
    %v144 = vunpack.c.l.b16 %v20
    %v145 = vunpack.c.l.b16 %v21
    %v146 = vunpack.c.l.b16 %v22
    %v147 = vunpack.c.l.b16 %v23
    %v148 = vunpack.c.l.b16 %v24
    %v149 = vunpack.c.l.b16 %v25
    %v150 = vunpack.c.l.b16 %v26
    %v151 = vunpack.c.l.b16 %v27
    %v152 = vunpack.c.l.b16 %v28
    %v153 = vunpack.c.l.b16 %v29
    %v154 = vunpack.c.l.b16 %v30
    %v155 = vunpack.c.l.b16 %v31
    %v156 = vunpack.c.l.b16 %v32
    %v157 = vunpack.c.l.b16 %v33
    %v158 = vunpack.c.l.b16 %v34
    %v159 = vunpack.c.l.b16 %v35
    %v160 = vunpack.c.l.b16 %v36
    %v161 = vunpack.c.l.b16 %v37
    %v162 = vunpack.c.l.b16 %v38
    %v163 = vunpack.c.l.b16 %v39
    %v164 = vunpack.c.l.b16 %v40
    %v165 = vunpack.c.l.b16 %v41
    %v166 = vunpack.c.l.b16 %v42
    %v167 = vunpack.c.l.b16 %v43
    %v168 = vpack.c.b16 %v141, %v140
    %v169 = vpack.c.b16 %v143, %v142
    %v170 = vpack.c.b16 %v145, %v144
    %v171 = vpack.c.b16 %v147, %v146
    %v172 = vpack.c.b16 %v149, %v148
    %v173 = vpack.c.b16 %v151, %v150
    %v174 = vpack.c.b16 %v153, %v152
    %v175 = vpack.c.b16 %v155, %v154
    %v176 = vpack.c.b16 %v157, %v156
    %v177 = vpack.c.b16 %v159, %v158
    %v178 = vpack.c.b16 %v161, %v160
    %v179 = vpack.c.b16 %v163, %v162
    %v180 = vpack.c.b16 %v165, %v164
    %v181 = vpack.c.b16 %v167, %v166
    %v183 = vsel %vm63, %v168, 0
    %v186 = vsel %vm63, %v169, 0
    %v189 = vsel %vm63, %v170, 0
    %v192 = vsel %vm63, %v171, 0
    %v195 = vsel %vm63, %v172, 0
    %v198 = vsel %vm63, %v173, 0
    %v201 = vsel %vm63, %v174, 0
    %v204 = vsel %vm63, %v175, 0
    %v207 = vsel %vm63, %v176, 0
    %v210 = vsel %vm63, %v177, 0
    %v213 = vsel %vm63, %v178, 0
    %v216 = vsel %vm63, %v179, 0
    %v219 = vsel %vm63, %v180, 0
    %v222 = vsel %vm63, %v181, 0
    %224 = vmatprep.subr.bf16.mxu0 0
    %225 = vmatpush1.bf16.msra.mxu0 0
    %226 = vmatprep.subr.bf16.mxu0 0
    %227 = vmatpush1.bf16.msra.mxu0 0
    %228 = vmatprep.subr.bf16.mxu0 0
    %229 = vmatpush1.bf16.msra.mxu0 0
    %230 = vmatprep.subr.bf16.mxu0 0
    %231 = vmatpush1.bf16.msra.mxu0 0
    %232 = vmatprep.subr.bf16.mxu0 0
    %233 = vmatpush1.bf16.msra.mxu0 0
    %234 = vmatprep.subr.bf16.mxu0 0
    %235 = vmatpush1.bf16.msra.mxu0 0
    %236 = vmatprep.subr.bf16.mxu0 0
    %237 = vmatpush1.bf16.msra.mxu0 0
    %238 = vmatprep.subr.bf16.mxu0 %v111
    %239 = vmatpush1.bf16.msra.mxu0 %v110
    %240 = vmatprep.subr.bf16.mxu0 0
    %241 = vmatpush2.bf16.msra.mxu0 0
    %242 = vmatprep.subr.bf16.mxu0 0
    %243 = vmatpush2.bf16.msra.mxu0 0
    %244 = vmatprep.subr.bf16.mxu0 0
    %245 = vmatpush2.bf16.msra.mxu0 0
    %246 = vmatprep.subr.bf16.mxu0 0
    %247 = vmatpush2.bf16.msra.mxu0 0
    %248 = vmatprep.subr.bf16.mxu0 0
    %249 = vmatpush2.bf16.msra.mxu0 0
    %250 = vmatprep.subr.bf16.mxu0 0
    %251 = vmatpush2.bf16.msra.mxu0 0
    %252 = vmatprep.subr.bf16.mxu0 0
    %253 = vmatpush2.bf16.msra.mxu0 0
    %254 = vmatprep.subr.bf16.mxu0 0
    %255 = vmatpush2.bf16.msra.mxu0 0
    %256 = vmatprep.mubr.bf16.mxu0 0
    %257 = vmatmul.mubr.bf16.gmra.mxu0 %v183
    %v258 = vpop.f32.mrf.mxu0
    %v259 = vadd.f32 0.0, %v258
    %v260 = vpop.f32.mrf.mxu0
    %v261 = vadd.f32 0.0, %v260
    %v262 = vpop.f32.mrf.mxu0
    %v263 = vadd.f32 0.0, %v262
    %v264 = vpop.f32.mrf.mxu0
    %v265 = vadd.f32 0.0, %v264
    %266 = vmatprep.mubr.bf16.mxu0 0
    %267 = vmatmul.mubr.bf16.gmra.mxu0 %v186
    %v268 = vpop.f32.mrf.mxu0
    %v269 = vadd.f32 0.0, %v268
    %v270 = vpop.f32.mrf.mxu0
    %v271 = vadd.f32 0.0, %v270
    %v272 = vpop.f32.mrf.mxu0
    %v273 = vadd.f32 0.0, %v272
    %v274 = vpop.f32.mrf.mxu0
    %v275 = vadd.f32 0.0, %v274
    %276 = vmatprep.mubr.bf16.mxu0 0
    %277 = vmatmul.mubr.bf16.gmra.mxu0 %v189
    %v278 = vpop.f32.mrf.mxu0
    %v279 = vadd.f32 0.0, %v278
    %v280 = vpop.f32.mrf.mxu0
    %v281 = vadd.f32 0.0, %v280
    %v282 = vpop.f32.mrf.mxu0
    %v283 = vadd.f32 0.0, %v282
    %v284 = vpop.f32.mrf.mxu0
    %v285 = vadd.f32 0.0, %v284
    %286 = vmatprep.mubr.bf16.mxu0 0
    %287 = vmatmul.mubr.bf16.gmra.mxu0 %v192
    %v288 = vpop.f32.mrf.mxu0
    %v289 = vadd.f32 0.0, %v288
    %v290 = vpop.f32.mrf.mxu0
    %v291 = vadd.f32 0.0, %v290
    %v292 = vpop.f32.mrf.mxu0
    %v293 = vadd.f32 0.0, %v292
    %v294 = vpop.f32.mrf.mxu0
    %v295 = vadd.f32 0.0, %v294
    %296 = vmatprep.mubr.bf16.mxu0 0
    %297 = vmatmul.mubr.bf16.gmra.mxu0 %v195
    %v298 = vpop.f32.mrf.mxu0
    %v299 = vadd.f32 0.0, %v298
    %v300 = vpop.f32.mrf.mxu0
    %v301 = vadd.f32 0.0, %v300
    %v302 = vpop.f32.mrf.mxu0
    %v303 = vadd.f32 0.0, %v302
    %v304 = vpop.f32.mrf.mxu0
    %v305 = vadd.f32 0.0, %v304
    %306 = vmatprep.mubr.bf16.mxu0 0
    %307 = vmatmul.mubr.bf16.gmra.mxu0 %v198
    %v308 = vpop.f32.mrf.mxu0
    %v309 = vadd.f32 0.0, %v308
    %v310 = vpop.f32.mrf.mxu0
    %v311 = vadd.f32 0.0, %v310
    %v312 = vpop.f32.mrf.mxu0
    %v313 = vadd.f32 0.0, %v312
    %v314 = vpop.f32.mrf.mxu0
    %v315 = vadd.f32 0.0, %v314
    %316 = vmatprep.mubr.bf16.mxu0 0
    %317 = vmatmul.mubr.bf16.gmra.mxu0 %v201
    %v318 = vpop.f32.mrf.mxu0
    %v319 = vadd.f32 0.0, %v318
    %v320 = vpop.f32.mrf.mxu0
    %v321 = vadd.f32 0.0, %v320
    %v322 = vpop.f32.mrf.mxu0
    %v323 = vadd.f32 0.0, %v322
    %v324 = vpop.f32.mrf.mxu0
    %v325 = vadd.f32 0.0, %v324
    %326 = vmatprep.mubr.bf16.mxu0 0
    %327 = vmatmul.mubr.bf16.gmra.mxu0 %v204
    %v328 = vpop.f32.mrf.mxu0
    %v329 = vadd.f32 0.0, %v328
    %v330 = vpop.f32.mrf.mxu0
    %v331 = vadd.f32 0.0, %v330
    %v332 = vpop.f32.mrf.mxu0
    %v333 = vadd.f32 0.0, %v332
    %v334 = vpop.f32.mrf.mxu0
    %v335 = vadd.f32 0.0, %v334
    %336 = vmatprep.mubr.bf16.mxu0 0
    %337 = vmatmul.mubr.bf16.gmra.mxu0 %v207
    %v338 = vpop.f32.mrf.mxu0
    %v339 = vadd.f32 0.0, %v338
    %v340 = vpop.f32.mrf.mxu0
    %v341 = vadd.f32 0.0, %v340
    %v342 = vpop.f32.mrf.mxu0
    %v343 = vadd.f32 0.0, %v342
    %v344 = vpop.f32.mrf.mxu0
    %v345 = vadd.f32 0.0, %v344
    %346 = vmatprep.mubr.bf16.mxu0 0
    %347 = vmatmul.mubr.bf16.gmra.mxu0 %v210
    %v348 = vpop.f32.mrf.mxu0
    %v349 = vadd.f32 0.0, %v348
    %v350 = vpop.f32.mrf.mxu0
    %v351 = vadd.f32 0.0, %v350
    %v352 = vpop.f32.mrf.mxu0
    %v353 = vadd.f32 0.0, %v352
    %v354 = vpop.f32.mrf.mxu0
    %v355 = vadd.f32 0.0, %v354
    %356 = vmatprep.mubr.bf16.mxu0 0
    %357 = vmatmul.mubr.bf16.gmra.mxu0 %v213
    %v358 = vpop.f32.mrf.mxu0
    %v359 = vadd.f32 0.0, %v358
    %v360 = vpop.f32.mrf.mxu0
    %v361 = vadd.f32 0.0, %v360
    %v362 = vpop.f32.mrf.mxu0
    %v363 = vadd.f32 0.0, %v362
    %v364 = vpop.f32.mrf.mxu0
    %v365 = vadd.f32 0.0, %v364
    %366 = vmatprep.mubr.bf16.mxu0 0
    %367 = vmatmul.mubr.bf16.gmra.mxu0 %v216
    %v368 = vpop.f32.mrf.mxu0
    %v369 = vadd.f32 0.0, %v368
    %v370 = vpop.f32.mrf.mxu0
    %v371 = vadd.f32 0.0, %v370
    %v372 = vpop.f32.mrf.mxu0
    %v373 = vadd.f32 0.0, %v372
    %v374 = vpop.f32.mrf.mxu0
    %v375 = vadd.f32 0.0, %v374
    %376 = vmatprep.mubr.bf16.mxu0 0
    %377 = vmatmul.mubr.bf16.gmra.mxu0 %v219
    %v378 = vpop.f32.mrf.mxu0
    %v379 = vadd.f32 0.0, %v378
    %v380 = vpop.f32.mrf.mxu0
    %v381 = vadd.f32 0.0, %v380
    %v382 = vpop.f32.mrf.mxu0
    %v383 = vadd.f32 0.0, %v382
    %v384 = vpop.f32.mrf.mxu0
    %v385 = vadd.f32 0.0, %v384
    %386 = vmatprep.mubr.bf16.mxu0 0
    %387 = vmatmul.mubr.bf16.gmra.mxu0 %v222
    %v388 = vpop.f32.mrf.mxu0
    %v389 = vadd.f32 0.0, %v388
    %v390 = vpop.f32.mrf.mxu0
    %v391 = vadd.f32 0.0, %v390
    %v392 = vpop.f32.mrf.mxu0
    %v393 = vadd.f32 0.0, %v392
    %v394 = vpop.f32.mrf.mxu0
    %v395 = vadd.f32 0.0, %v394
    %396 = vdwg.mxu0
    %397 = vst [vmem:[#allocation2] sm:$0xff] %v259
    %vm398 = vcmask 785408
    %399 = vst.msk [vmem:[#allocation2 + $0x8] sm:$0xff] %vm398, %v261
    %400 = vst [vmem:[#allocation2 + $0x10] sm:$0xff] %v263
    %401 = vst.msk [vmem:[#allocation2 + $0x18] sm:$0xff] %vm398, %v265
    %402 = vst [vmem:[#allocation2 + $0x20] sm:$0xff] %v269
    %403 = vst.msk [vmem:[#allocation2 + $0x28] sm:$0xff] %vm398, %v271
    %404 = vst [vmem:[#allocation2 + $0x30] sm:$0xff] %v273
    %405 = vst.msk [vmem:[#allocation2 + $0x38] sm:$0xff] %vm398, %v275
    %406 = vst [vmem:[#allocation2 + $0x40] sm:$0xff] %v279
    %407 = vst.msk [vmem:[#allocation2 + $0x48] sm:$0xff] %vm398, %v281
    %408 = vst [vmem:[#allocation2 + $0x50] sm:$0xff] %v283
    %409 = vst.msk [vmem:[#allocation2 + $0x58] sm:$0xff] %vm398, %v285
    %410 = vst [vmem:[#allocation2 + $0x60] sm:$0xff] %v289
    %411 = vst.msk [vmem:[#allocation2 + $0x68] sm:$0xff] %vm398, %v291
    %412 = vst [vmem:[#allocation2 + $0x70] sm:$0xff] %v293
    %413 = vst.msk [vmem:[#allocation2 + $0x78] sm:$0xff] %vm398, %v295
    %414 = vst [vmem:[#allocation2 + $0x80] sm:$0xff] %v299
    %415 = vst.msk [vmem:[#allocation2 + $0x88] sm:$0xff] %vm398, %v301
    %416 = vst [vmem:[#allocation2 + $0x90] sm:$0xff] %v303
    %417 = vst.msk [vmem:[#allocation2 + $0x98] sm:$0xff] %vm398, %v305
    %418 = vst [vmem:[#allocation2 + $0xa0] sm:$0xff] %v309
    %419 = vst.msk [vmem:[#allocation2 + $0xa8] sm:$0xff] %vm398, %v311
    %420 = vst [vmem:[#allocation2 + $0xb0] sm:$0xff] %v313
    %421 = vst.msk [vmem:[#allocation2 + $0xb8] sm:$0xff] %vm398, %v315
    %422 = vst [vmem:[#allocation2 + $0xc0] sm:$0xff] %v319
    %423 = vst.msk [vmem:[#allocation2 + $0xc8] sm:$0xff] %vm398, %v321
    %424 = vst [vmem:[#allocation2 + $0xd0] sm:$0xff] %v323
    %425 = vst.msk [vmem:[#allocation2 + $0xd8] sm:$0xff] %vm398, %v325
    %426 = vst [vmem:[#allocation2 + $0xe0] sm:$0xff] %v329
    %427 = vst.msk [vmem:[#allocation2 + $0xe8] sm:$0xff] %vm398, %v331
    %428 = vst [vmem:[#allocation2 + $0xf0] sm:$0xff] %v333
    %429 = vst.msk [vmem:[#allocation2 + $0xf8] sm:$0xff] %vm398, %v335
    %430 = vst [vmem:[#allocation2 + $0x100] sm:$0xff] %v339
    %431 = vst.msk [vmem:[#allocation2 + $0x108] sm:$0xff] %vm398, %v341
    %432 = vst [vmem:[#allocation2 + $0x110] sm:$0xff] %v343
    %433 = vst.msk [vmem:[#allocation2 + $0x118] sm:$0xff] %vm398, %v345
    %434 = vst [vmem:[#allocation2 + $0x120] sm:$0xff] %v349
    %435 = vst.msk [vmem:[#allocation2 + $0x128] sm:$0xff] %vm398, %v351
    %436 = vst [vmem:[#allocation2 + $0x130] sm:$0xff] %v353
    %437 = vst.msk [vmem:[#allocation2 + $0x138] sm:$0xff] %vm398, %v355
    %438 = vst [vmem:[#allocation2 + $0x140] sm:$0xff] %v359
    %439 = vst.msk [vmem:[#allocation2 + $0x148] sm:$0xff] %vm398, %v361
    %440 = vst [vmem:[#allocation2 + $0x150] sm:$0xff] %v363
    %441 = vst.msk [vmem:[#allocation2 + $0x158] sm:$0xff] %vm398, %v365
    %442 = vst [vmem:[#allocation2 + $0x160] sm:$0xff] %v369
    %443 = vst.msk [vmem:[#allocation2 + $0x168] sm:$0xff] %vm398, %v371
    %444 = vst [vmem:[#allocation2 + $0x170] sm:$0xff] %v373
    %445 = vst.msk [vmem:[#allocation2 + $0x178] sm:$0xff] %vm398, %v375
    %446 = vst [vmem:[#allocation2 + $0x180] sm:$0xff] %v379
    %447 = vst.msk [vmem:[#allocation2 + $0x188] sm:$0xff] %vm398, %v381
    %448 = vst [vmem:[#allocation2 + $0x190] sm:$0xff] %v383
    %449 = vst.msk [vmem:[#allocation2 + $0x198] sm:$0xff] %vm398, %v385
    %450 = vst [vmem:[#allocation2 + $0x1a0] sm:$0xff] %v389
    %451 = vst.msk [vmem:[#allocation2 + $0x1a8] sm:$0xff] %vm398, %v391
    %452 = vst [vmem:[#allocation2 + $0x1b0] sm:$0xff] %v393
    %453 = vst.msk [vmem:[#allocation2 + $0x1b8] sm:$0xff] %vm398, %v395
    %s454 = scalar_lea.vmem %s0, 8
    %v455 = vld [vmem:[%s454] sm:$0xf]
    %v456 = vld [vmem:[%s454 + $0x4] sm:$0xf]
    %v457 = vld [vmem:[%s2] sm:$0xff]
    %v458 = vld [vmem:[%s2 + $0x8] sm:$0xff]
    %v461 = vunpack.c.l.b16 %v455
    %v462 = vunpack.c.l.b16 %v456
    %v463 = vpack.c.b16 %v462, %v461
    %v466 = vunpack.c.l.b16 %v457
    %v467 = vunpack.c.h.b16 %v457
    %v468 = vunpack.c.l.b16 %v458
    %v469 = vunpack.c.h.b16 %v458
    %v470 = vpack.c.b16 %v468, %v466
    %v471 = vpack.c.b16 %v469, %v467
    %v475 = vsel %vm63, %v463, 0
    %477 = vmatprep.subr.bf16.mxu0 0
    %478 = vmatpush1.bf16.msra.mxu0 0
    %479 = vmatprep.subr.bf16.mxu0 0
    %480 = vmatpush1.bf16.msra.mxu0 0
    %481 = vmatprep.subr.bf16.mxu0 0
    %482 = vmatpush1.bf16.msra.mxu0 0
    %483 = vmatprep.subr.bf16.mxu0 0
    %484 = vmatpush1.bf16.msra.mxu0 0
    %485 = vmatprep.subr.bf16.mxu0 0
    %486 = vmatpush1.bf16.msra.mxu0 0
    %487 = vmatprep.subr.bf16.mxu0 0
    %488 = vmatpush1.bf16.msra.mxu0 0
    %489 = vmatprep.subr.bf16.mxu0 0
    %490 = vmatpush1.bf16.msra.mxu0 0
    %491 = vmatprep.subr.bf16.mxu0 %v471
    %492 = vmatpush1.bf16.msra.mxu0 %v470
    %493 = vmatprep.subr.bf16.mxu0 0
    %494 = vmatpush2.bf16.msra.mxu0 0
    %495 = vmatprep.subr.bf16.mxu0 0
    %496 = vmatpush2.bf16.msra.mxu0 0
    %497 = vmatprep.subr.bf16.mxu0 0
    %498 = vmatpush2.bf16.msra.mxu0 0
    %499 = vmatprep.subr.bf16.mxu0 0
    %500 = vmatpush2.bf16.msra.mxu0 0
    %501 = vmatprep.subr.bf16.mxu0 0
    %502 = vmatpush2.bf16.msra.mxu0 0
    %503 = vmatprep.subr.bf16.mxu0 0
    %504 = vmatpush2.bf16.msra.mxu0 0
    %505 = vmatprep.subr.bf16.mxu0 0
    %506 = vmatpush2.bf16.msra.mxu0 0
    %507 = vmatprep.subr.bf16.mxu0 0
    %508 = vmatpush2.bf16.msra.mxu0 0
    %509 = vmatprep.mubr.bf16.mxu0 0
    %510 = vmatmul.mubr.bf16.gmra.mxu0 %v475
    %v511 = vpop.f32.mrf.mxu0
    %v512 = vadd.f32 0.0, %v511
    %v513 = vpop.f32.mrf.mxu0
    %v514 = vadd.f32 0.0, %v513
    %v515 = vpop.f32.mrf.mxu0
    %v516 = vadd.f32 0.0, %v515
    %v517 = vpop.f32.mrf.mxu0
    %v518 = vadd.f32 0.0, %v517
    %519 = vdwg.mxu0
    %v520 = vpack.c.bf16 %v516, %v512
    %v521 = vpack.c.bf16 %v518, %v514
    %522 = vmatprep.subr.bf16.mxu0 0
    %523 = vmatpush1.bf16.msra.mxu0 0
    %524 = vmatprep.subr.bf16.mxu0 0
    %525 = vmatpush1.bf16.msra.mxu0 0
    %526 = vmatprep.subr.bf16.mxu0 0
    %527 = vmatpush1.bf16.msra.mxu0 0
    %528 = vmatprep.subr.bf16.mxu0 0
    %529 = vmatpush1.bf16.msra.mxu0 0
    %530 = vmatprep.subr.bf16.mxu0 0
    %531 = vmatpush1.bf16.msra.mxu0 0
    %532 = vmatprep.subr.bf16.mxu0 0
    %533 = vmatpush1.bf16.msra.mxu0 0
    %534 = vmatprep.subr.bf16.mxu0 0
    %535 = vmatpush1.bf16.msra.mxu0 0
    %536 = vmatprep.subr.bf16.mxu0 %v521
    %537 = vmatpush1.bf16.msra.mxu0 %v520
    %538 = vmatprep.subr.bf16.mxu0 0
    %539 = vmatpush2.bf16.msra.mxu0 0
    %540 = vmatprep.subr.bf16.mxu0 0
    %541 = vmatpush2.bf16.msra.mxu0 0
    %542 = vmatprep.subr.bf16.mxu0 0
    %543 = vmatpush2.bf16.msra.mxu0 0
    %544 = vmatprep.subr.bf16.mxu0 0
    %545 = vmatpush2.bf16.msra.mxu0 0
    %546 = vmatprep.subr.bf16.mxu0 0
    %547 = vmatpush2.bf16.msra.mxu0 0
    %548 = vmatprep.subr.bf16.mxu0 0
    %549 = vmatpush2.bf16.msra.mxu0 0
    %550 = vmatprep.subr.bf16.mxu0 0
    %551 = vmatpush2.bf16.msra.mxu0 0
    %552 = vmatprep.subr.bf16.mxu0 0
    %553 = vmatpush2.bf16.msra.mxu0 0
    %554 = vmatprep.mubr.bf16.mxu0 0
    %555 = vmatmul.mubr.bf16.gmra.mxu0 %v183
    %v556 = vpop.f32.mrf.mxu0
    %v557 = vadd.f32 0.0, %v556
    %v558 = vpop.f32.mrf.mxu0
    %v559 = vadd.f32 0.0, %v558
    %v560 = vpop.f32.mrf.mxu0
    %v561 = vadd.f32 0.0, %v560
    %v562 = vpop.f32.mrf.mxu0
    %v563 = vadd.f32 0.0, %v562
    %564 = vmatprep.mubr.bf16.mxu0 0
    %565 = vmatmul.mubr.bf16.gmra.mxu0 %v186
    %v566 = vpop.f32.mrf.mxu0
    %v567 = vadd.f32 0.0, %v566
    %v568 = vpop.f32.mrf.mxu0
    %v569 = vadd.f32 0.0, %v568
    %v570 = vpop.f32.mrf.mxu0
    %v571 = vadd.f32 0.0, %v570
    %v572 = vpop.f32.mrf.mxu0
    %v573 = vadd.f32 0.0, %v572
    %574 = vmatprep.mubr.bf16.mxu0 0
    %575 = vmatmul.mubr.bf16.gmra.mxu0 %v189
    %v576 = vpop.f32.mrf.mxu0
    %v577 = vadd.f32 0.0, %v576
    %v578 = vpop.f32.mrf.mxu0
    %v579 = vadd.f32 0.0, %v578
    %v580 = vpop.f32.mrf.mxu0
    %v581 = vadd.f32 0.0, %v580
    %v582 = vpop.f32.mrf.mxu0
    %v583 = vadd.f32 0.0, %v582
    %584 = vmatprep.mubr.bf16.mxu0 0
    %585 = vmatmul.mubr.bf16.gmra.mxu0 %v192
    %v586 = vpop.f32.mrf.mxu0
    %v587 = vadd.f32 0.0, %v586
    %v588 = vpop.f32.mrf.mxu0
    %v589 = vadd.f32 0.0, %v588
    %v590 = vpop.f32.mrf.mxu0
    %v591 = vadd.f32 0.0, %v590
    %v592 = vpop.f32.mrf.mxu0
    %v593 = vadd.f32 0.0, %v592
    %594 = vmatprep.mubr.bf16.mxu0 0
    %595 = vmatmul.mubr.bf16.gmra.mxu0 %v195
    %v596 = vpop.f32.mrf.mxu0
    %v597 = vadd.f32 0.0, %v596
    %v598 = vpop.f32.mrf.mxu0
    %v599 = vadd.f32 0.0, %v598
    %v600 = vpop.f32.mrf.mxu0
    %v601 = vadd.f32 0.0, %v600
    %v602 = vpop.f32.mrf.mxu0
    %v603 = vadd.f32 0.0, %v602
    %604 = vmatprep.mubr.bf16.mxu0 0
    %605 = vmatmul.mubr.bf16.gmra.mxu0 %v198
    %v606 = vpop.f32.mrf.mxu0
    %v607 = vadd.f32 0.0, %v606
    %v608 = vpop.f32.mrf.mxu0
    %v609 = vadd.f32 0.0, %v608
    %v610 = vpop.f32.mrf.mxu0
    %v611 = vadd.f32 0.0, %v610
    %v612 = vpop.f32.mrf.mxu0
    %v613 = vadd.f32 0.0, %v612
    %614 = vmatprep.mubr.bf16.mxu0 0
    %615 = vmatmul.mubr.bf16.gmra.mxu0 %v201
    %v616 = vpop.f32.mrf.mxu0
    %v617 = vadd.f32 0.0, %v616
    %v618 = vpop.f32.mrf.mxu0
    %v619 = vadd.f32 0.0, %v618
    %v620 = vpop.f32.mrf.mxu0
    %v621 = vadd.f32 0.0, %v620
    %v622 = vpop.f32.mrf.mxu0
    %v623 = vadd.f32 0.0, %v622
    %624 = vmatprep.mubr.bf16.mxu0 0
    %625 = vmatmul.mubr.bf16.gmra.mxu0 %v204
    %v626 = vpop.f32.mrf.mxu0
    %v627 = vadd.f32 0.0, %v626
    %v628 = vpop.f32.mrf.mxu0
    %v629 = vadd.f32 0.0, %v628
    %v630 = vpop.f32.mrf.mxu0
    %v631 = vadd.f32 0.0, %v630
    %v632 = vpop.f32.mrf.mxu0
    %v633 = vadd.f32 0.0, %v632
    %634 = vmatprep.mubr.bf16.mxu0 0
    %635 = vmatmul.mubr.bf16.gmra.mxu0 %v207
    %v636 = vpop.f32.mrf.mxu0
    %v637 = vadd.f32 0.0, %v636
    %v638 = vpop.f32.mrf.mxu0
    %v639 = vadd.f32 0.0, %v638
    %v640 = vpop.f32.mrf.mxu0
    %v641 = vadd.f32 0.0, %v640
    %v642 = vpop.f32.mrf.mxu0
    %v643 = vadd.f32 0.0, %v642
    %644 = vmatprep.mubr.bf16.mxu0 0
    %645 = vmatmul.mubr.bf16.gmra.mxu0 %v210
    %v646 = vpop.f32.mrf.mxu0
    %v647 = vadd.f32 0.0, %v646
    %v648 = vpop.f32.mrf.mxu0
    %v649 = vadd.f32 0.0, %v648
    %v650 = vpop.f32.mrf.mxu0
    %v651 = vadd.f32 0.0, %v650
    %v652 = vpop.f32.mrf.mxu0
    %v653 = vadd.f32 0.0, %v652
    %654 = vmatprep.mubr.bf16.mxu0 0
    %655 = vmatmul.mubr.bf16.gmra.mxu0 %v213
    %v656 = vpop.f32.mrf.mxu0
    %v657 = vadd.f32 0.0, %v656
    %v658 = vpop.f32.mrf.mxu0
    %v659 = vadd.f32 0.0, %v658
    %v660 = vpop.f32.mrf.mxu0
    %v661 = vadd.f32 0.0, %v660
    %v662 = vpop.f32.mrf.mxu0
    %v663 = vadd.f32 0.0, %v662
    %664 = vmatprep.mubr.bf16.mxu0 0
    %665 = vmatmul.mubr.bf16.gmra.mxu0 %v216
    %v666 = vpop.f32.mrf.mxu0
    %v667 = vadd.f32 0.0, %v666
    %v668 = vpop.f32.mrf.mxu0
    %v669 = vadd.f32 0.0, %v668
    %v670 = vpop.f32.mrf.mxu0
    %v671 = vadd.f32 0.0, %v670
    %v672 = vpop.f32.mrf.mxu0
    %v673 = vadd.f32 0.0, %v672
    %674 = vmatprep.mubr.bf16.mxu0 0
    %675 = vmatmul.mubr.bf16.gmra.mxu0 %v219
    %v676 = vpop.f32.mrf.mxu0
    %v677 = vadd.f32 0.0, %v676
    %v678 = vpop.f32.mrf.mxu0
    %v679 = vadd.f32 0.0, %v678
    %v680 = vpop.f32.mrf.mxu0
    %v681 = vadd.f32 0.0, %v680
    %v682 = vpop.f32.mrf.mxu0
    %v683 = vadd.f32 0.0, %v682
    %684 = vmatprep.mubr.bf16.mxu0 0
    %685 = vmatmul.mubr.bf16.gmra.mxu0 %v222
    %v686 = vpop.f32.mrf.mxu0
    %v687 = vadd.f32 0.0, %v686
    %v688 = vpop.f32.mrf.mxu0
    %v689 = vadd.f32 0.0, %v688
    %v690 = vpop.f32.mrf.mxu0
    %v691 = vadd.f32 0.0, %v690
    %v692 = vpop.f32.mrf.mxu0
    %v693 = vadd.f32 0.0, %v692
    %694 = vdwg.mxu0
    %s695 = scalar_lea.vmem [#allocation2], 448
    %696 = vst [vmem:[%s695] sm:$0xff] %v557
    %697 = vst.msk [vmem:[%s695 + $0x8] sm:$0xff] %vm398, %v559
    %698 = vst [vmem:[%s695 + $0x10] sm:$0xff] %v561
    %699 = vst.msk [vmem:[%s695 + $0x18] sm:$0xff] %vm398, %v563
    %700 = vst [vmem:[%s695 + $0x20] sm:$0xff] %v567
    %701 = vst.msk [vmem:[%s695 + $0x28] sm:$0xff] %vm398, %v569
    %702 = vst [vmem:[%s695 + $0x30] sm:$0xff] %v571
    %703 = vst.msk [vmem:[%s695 + $0x38] sm:$0xff] %vm398, %v573
    %704 = vst [vmem:[%s695 + $0x40] sm:$0xff] %v577
    %705 = vst.msk [vmem:[%s695 + $0x48] sm:$0xff] %vm398, %v579
    %706 = vst [vmem:[%s695 + $0x50] sm:$0xff] %v581
    %707 = vst.msk [vmem:[%s695 + $0x58] sm:$0xff] %vm398, %v583
    %708 = vst [vmem:[%s695 + $0x60] sm:$0xff] %v587
    %709 = vst.msk [vmem:[%s695 + $0x68] sm:$0xff] %vm398, %v589
    %710 = vst [vmem:[%s695 + $0x70] sm:$0xff] %v591
    %711 = vst.msk [vmem:[%s695 + $0x78] sm:$0xff] %vm398, %v593
    %712 = vst [vmem:[%s695 + $0x80] sm:$0xff] %v597
    %713 = vst.msk [vmem:[%s695 + $0x88] sm:$0xff] %vm398, %v599
    %714 = vst [vmem:[%s695 + $0x90] sm:$0xff] %v601
    %715 = vst.msk [vmem:[%s695 + $0x98] sm:$0xff] %vm398, %v603
    %716 = vst [vmem:[%s695 + $0xa0] sm:$0xff] %v607
    %717 = vst.msk [vmem:[%s695 + $0xa8] sm:$0xff] %vm398, %v609
    %718 = vst [vmem:[%s695 + $0xb0] sm:$0xff] %v611
    %719 = vst.msk [vmem:[%s695 + $0xb8] sm:$0xff] %vm398, %v613
    %720 = vst [vmem:[%s695 + $0xc0] sm:$0xff] %v617
    %721 = vst.msk [vmem:[%s695 + $0xc8] sm:$0xff] %vm398, %v619
    %722 = vst [vmem:[%s695 + $0xd0] sm:$0xff] %v621
    %723 = vst.msk [vmem:[%s695 + $0xd8] sm:$0xff] %vm398, %v623
    %724 = vst [vmem:[%s695 + $0xe0] sm:$0xff] %v627
    %725 = vst.msk [vmem:[%s695 + $0xe8] sm:$0xff] %vm398, %v629
    %726 = vst [vmem:[%s695 + $0xf0] sm:$0xff] %v631
    %727 = vst.msk [vmem:[%s695 + $0xf8] sm:$0xff] %vm398, %v633
    %728 = vst [vmem:[%s695 + $0x100] sm:$0xff] %v637
    %729 = vst.msk [vmem:[%s695 + $0x108] sm:$0xff] %vm398, %v639
    %730 = vst [vmem:[%s695 + $0x110] sm:$0xff] %v641
    %731 = vst.msk [vmem:[%s695 + $0x118] sm:$0xff] %vm398, %v643
    %732 = vst [vmem:[%s695 + $0x120] sm:$0xff] %v647
    %733 = vst.msk [vmem:[%s695 + $0x128] sm:$0xff] %vm398, %v649
    %734 = vst [vmem:[%s695 + $0x130] sm:$0xff] %v651
    %735 = vst.msk [vmem:[%s695 + $0x138] sm:$0xff] %vm398, %v653
    %736 = vst [vmem:[%s695 + $0x140] sm:$0xff] %v657
    %737 = vst.msk [vmem:[%s695 + $0x148] sm:$0xff] %vm398, %v659
    %738 = vst [vmem:[%s695 + $0x150] sm:$0xff] %v661
    %739 = vst.msk [vmem:[%s695 + $0x158] sm:$0xff] %vm398, %v663
    %740 = vst [vmem:[%s695 + $0x160] sm:$0xff] %v667
    %741 = vst.msk [vmem:[%s695 + $0x168] sm:$0xff] %vm398, %v669
    %742 = vst [vmem:[%s695 + $0x170] sm:$0xff] %v671
    %743 = vst.msk [vmem:[%s695 + $0x178] sm:$0xff] %vm398, %v673
    %744 = vst [vmem:[%s695 + $0x180] sm:$0xff] %v677
    %745 = vst.msk [vmem:[%s695 + $0x188] sm:$0xff] %vm398, %v679
    %746 = vst [vmem:[%s695 + $0x190] sm:$0xff] %v681
    %747 = vst.msk [vmem:[%s695 + $0x198] sm:$0xff] %vm398, %v683
    %748 = vst [vmem:[%s695 + $0x1a0] sm:$0xff] %v687
    %749 = vst.msk [vmem:[%s695 + $0x1a8] sm:$0xff] %vm398, %v689
    %750 = vst [vmem:[%s695 + $0x1b0] sm:$0xff] %v691
    %751 = vst.msk [vmem:[%s695 + $0x1b8] sm:$0xff] %vm398, %v693
    %s752 = scalar_lea.vmem %s0, 16
    %v753 = vld [vmem:[%s752] sm:$0xf]
    %v754 = vld [vmem:[%s752 + $0x4] sm:$0xf]
    %v755 = vld [vmem:[%s2] sm:$0xff]
    %v756 = vld [vmem:[%s2 + $0x8] sm:$0xff]
    %v759 = vunpack.c.l.b16 %v753
    %v760 = vunpack.c.l.b16 %v754
    %v761 = vpack.c.b16 %v760, %v759
    %v764 = vunpack.c.l.b16 %v755
    %v765 = vunpack.c.h.b16 %v755
    %v766 = vunpack.c.l.b16 %v756
    %v767 = vunpack.c.h.b16 %v756
    %v768 = vpack.c.b16 %v766, %v764
    %v769 = vpack.c.b16 %v767, %v765
    %v773 = vsel %vm63, %v761, 0
    %775 = vmatprep.subr.bf16.mxu0 0
    %776 = vmatpush1.bf16.msra.mxu0 0
    %777 = vmatprep.subr.bf16.mxu0 0
    %778 = vmatpush1.bf16.msra.mxu0 0
    %779 = vmatprep.subr.bf16.mxu0 0
    %780 = vmatpush1.bf16.msra.mxu0 0
    %781 = vmatprep.subr.bf16.mxu0 0
    %782 = vmatpush1.bf16.msra.mxu0 0
    %783 = vmatprep.subr.bf16.mxu0 0
    %784 = vmatpush1.bf16.msra.mxu0 0
    %785 = vmatprep.subr.bf16.mxu0 0
    %786 = vmatpush1.bf16.msra.mxu0 0
    %787 = vmatprep.subr.bf16.mxu0 0
    %788 = vmatpush1.bf16.msra.mxu0 0
    %789 = vmatprep.subr.bf16.mxu0 %v769
    %790 = vmatpush1.bf16.msra.mxu0 %v768
    %791 = vmatprep.subr.bf16.mxu0 0
    %792 = vmatpush2.bf16.msra.mxu0 0
    %793 = vmatprep.subr.bf16.mxu0 0
    %794 = vmatpush2.bf16.msra.mxu0 0
    %795 = vmatprep.subr.bf16.mxu0 0
    %796 = vmatpush2.bf16.msra.mxu0 0
    %797 = vmatprep.subr.bf16.mxu0 0
    %798 = vmatpush2.bf16.msra.mxu0 0
    %799 = vmatprep.subr.bf16.mxu0 0
    %800 = vmatpush2.bf16.msra.mxu0 0
    %801 = vmatprep.subr.bf16.mxu0 0
    %802 = vmatpush2.bf16.msra.mxu0 0
    %803 = vmatprep.subr.bf16.mxu0 0
    %804 = vmatpush2.bf16.msra.mxu0 0
    %805 = vmatprep.subr.bf16.mxu0 0
    %806 = vmatpush2.bf16.msra.mxu0 0
    %807 = vmatprep.mubr.bf16.mxu0 0
    %808 = vmatmul.mubr.bf16.gmra.mxu0 %v773
    %v809 = vpop.f32.mrf.mxu0
    %v810 = vadd.f32 0.0, %v809
    %v811 = vpop.f32.mrf.mxu0
    %v812 = vadd.f32 0.0, %v811
    %v813 = vpop.f32.mrf.mxu0
    %v814 = vadd.f32 0.0, %v813
    %v815 = vpop.f32.mrf.mxu0
    %v816 = vadd.f32 0.0, %v815
    %817 = vdwg.mxu0
    %v818 = vpack.c.bf16 %v814, %v810
    %v819 = vpack.c.bf16 %v816, %v812
    %820 = vmatprep.subr.bf16.mxu0 0
    %821 = vmatpush1.bf16.msra.mxu0 0
    %822 = vmatprep.subr.bf16.mxu0 0
    %823 = vmatpush1.bf16.msra.mxu0 0
    %824 = vmatprep.subr.bf16.mxu0 0
    %825 = vmatpush1.bf16.msra.mxu0 0
    %826 = vmatprep.subr.bf16.mxu0 0
    %827 = vmatpush1.bf16.msra.mxu0 0
    %828 = vmatprep.subr.bf16.mxu0 0
    %829 = vmatpush1.bf16.msra.mxu0 0
    %830 = vmatprep.subr.bf16.mxu0 0
    %831 = vmatpush1.bf16.msra.mxu0 0
    %832 = vmatprep.subr.bf16.mxu0 0
    %833 = vmatpush1.bf16.msra.mxu0 0
    %834 = vmatprep.subr.bf16.mxu0 %v819
    %835 = vmatpush1.bf16.msra.mxu0 %v818
    %836 = vmatprep.subr.bf16.mxu0 0
    %837 = vmatpush2.bf16.msra.mxu0 0
    %838 = vmatprep.subr.bf16.mxu0 0
    %839 = vmatpush2.bf16.msra.mxu0 0
    %840 = vmatprep.subr.bf16.mxu0 0
    %841 = vmatpush2.bf16.msra.mxu0 0
    %842 = vmatprep.subr.bf16.mxu0 0
    %843 = vmatpush2.bf16.msra.mxu0 0
    %844 = vmatprep.subr.bf16.mxu0 0
    %845 = vmatpush2.bf16.msra.mxu0 0
    %846 = vmatprep.subr.bf16.mxu0 0
    %847 = vmatpush2.bf16.msra.mxu0 0
    %848 = vmatprep.subr.bf16.mxu0 0
    %849 = vmatpush2.bf16.msra.mxu0 0
    %850 = vmatprep.subr.bf16.mxu0 0
    %851 = vmatpush2.bf16.msra.mxu0 0
    %852 = vmatprep.mubr.bf16.mxu0 0
    %853 = vmatmul.mubr.bf16.gmra.mxu0 %v183
    %v854 = vpop.f32.mrf.mxu0
    %v855 = vadd.f32 0.0, %v854
    %v856 = vpop.f32.mrf.mxu0
    %v857 = vadd.f32 0.0, %v856
    %v858 = vpop.f32.mrf.mxu0
    %v859 = vadd.f32 0.0, %v858
    %v860 = vpop.f32.mrf.mxu0
    %v861 = vadd.f32 0.0, %v860
    %862 = vmatprep.mubr.bf16.mxu0 0
    %863 = vmatmul.mubr.bf16.gmra.mxu0 %v186
    %v864 = vpop.f32.mrf.mxu0
    %v865 = vadd.f32 0.0, %v864
    %v866 = vpop.f32.mrf.mxu0
    %v867 = vadd.f32 0.0, %v866
    %v868 = vpop.f32.mrf.mxu0
    %v869 = vadd.f32 0.0, %v868
    %v870 = vpop.f32.mrf.mxu0
    %v871 = vadd.f32 0.0, %v870
    %872 = vmatprep.mubr.bf16.mxu0 0
    %873 = vmatmul.mubr.bf16.gmra.mxu0 %v189
    %v874 = vpop.f32.mrf.mxu0
    %v875 = vadd.f32 0.0, %v874
    %v876 = vpop.f32.mrf.mxu0
    %v877 = vadd.f32 0.0, %v876
    %v878 = vpop.f32.mrf.mxu0
    %v879 = vadd.f32 0.0, %v878
    %v880 = vpop.f32.mrf.mxu0
    %v881 = vadd.f32 0.0, %v880
    %882 = vmatprep.mubr.bf16.mxu0 0
    %883 = vmatmul.mubr.bf16.gmra.mxu0 %v192
    %v884 = vpop.f32.mrf.mxu0
    %v885 = vadd.f32 0.0, %v884
    %v886 = vpop.f32.mrf.mxu0
    %v887 = vadd.f32 0.0, %v886
    %v888 = vpop.f32.mrf.mxu0
    %v889 = vadd.f32 0.0, %v888
    %v890 = vpop.f32.mrf.mxu0
    %v891 = vadd.f32 0.0, %v890
    %892 = vmatprep.mubr.bf16.mxu0 0
    %893 = vmatmul.mubr.bf16.gmra.mxu0 %v195
    %v894 = vpop.f32.mrf.mxu0
    %v895 = vadd.f32 0.0, %v894
    %v896 = vpop.f32.mrf.mxu0
    %v897 = vadd.f32 0.0, %v896
    %v898 = vpop.f32.mrf.mxu0
    %v899 = vadd.f32 0.0, %v898
    %v900 = vpop.f32.mrf.mxu0
    %v901 = vadd.f32 0.0, %v900
    %902 = vmatprep.mubr.bf16.mxu0 0
    %903 = vmatmul.mubr.bf16.gmra.mxu0 %v198
    %v904 = vpop.f32.mrf.mxu0
    %v905 = vadd.f32 0.0, %v904
    %v906 = vpop.f32.mrf.mxu0
    %v907 = vadd.f32 0.0, %v906
    %v908 = vpop.f32.mrf.mxu0
    %v909 = vadd.f32 0.0, %v908
    %v910 = vpop.f32.mrf.mxu0
    %v911 = vadd.f32 0.0, %v910
    %912 = vmatprep.mubr.bf16.mxu0 0
    %913 = vmatmul.mubr.bf16.gmra.mxu0 %v201
    %v914 = vpop.f32.mrf.mxu0
    %v915 = vadd.f32 0.0, %v914
    %v916 = vpop.f32.mrf.mxu0
    %v917 = vadd.f32 0.0, %v916
    %v918 = vpop.f32.mrf.mxu0
    %v919 = vadd.f32 0.0, %v918
    %v920 = vpop.f32.mrf.mxu0
    %v921 = vadd.f32 0.0, %v920
    %922 = vmatprep.mubr.bf16.mxu0 0
    %923 = vmatmul.mubr.bf16.gmra.mxu0 %v204
    %v924 = vpop.f32.mrf.mxu0
    %v925 = vadd.f32 0.0, %v924
    %v926 = vpop.f32.mrf.mxu0
    %v927 = vadd.f32 0.0, %v926
    %v928 = vpop.f32.mrf.mxu0
    %v929 = vadd.f32 0.0, %v928
    %v930 = vpop.f32.mrf.mxu0
    %v931 = vadd.f32 0.0, %v930
    %932 = vmatprep.mubr.bf16.mxu0 0
    %933 = vmatmul.mubr.bf16.gmra.mxu0 %v207
    %v934 = vpop.f32.mrf.mxu0
    %v935 = vadd.f32 0.0, %v934
    %v936 = vpop.f32.mrf.mxu0
    %v937 = vadd.f32 0.0, %v936
    %v938 = vpop.f32.mrf.mxu0
    %v939 = vadd.f32 0.0, %v938
    %v940 = vpop.f32.mrf.mxu0
    %v941 = vadd.f32 0.0, %v940
    %942 = vmatprep.mubr.bf16.mxu0 0
    %943 = vmatmul.mubr.bf16.gmra.mxu0 %v210
    %v944 = vpop.f32.mrf.mxu0
    %v945 = vadd.f32 0.0, %v944
    %v946 = vpop.f32.mrf.mxu0
    %v947 = vadd.f32 0.0, %v946
    %v948 = vpop.f32.mrf.mxu0
    %v949 = vadd.f32 0.0, %v948
    %v950 = vpop.f32.mrf.mxu0
    %v951 = vadd.f32 0.0, %v950
    %952 = vmatprep.mubr.bf16.mxu0 0
    %953 = vmatmul.mubr.bf16.gmra.mxu0 %v213
    %v954 = vpop.f32.mrf.mxu0
    %v955 = vadd.f32 0.0, %v954
    %v956 = vpop.f32.mrf.mxu0
    %v957 = vadd.f32 0.0, %v956
    %v958 = vpop.f32.mrf.mxu0
    %v959 = vadd.f32 0.0, %v958
    %v960 = vpop.f32.mrf.mxu0
    %v961 = vadd.f32 0.0, %v960
    %962 = vmatprep.mubr.bf16.mxu0 0
    %963 = vmatmul.mubr.bf16.gmra.mxu0 %v216
    %v964 = vpop.f32.mrf.mxu0
    %v965 = vadd.f32 0.0, %v964
    %v966 = vpop.f32.mrf.mxu0
    %v967 = vadd.f32 0.0, %v966
    %v968 = vpop.f32.mrf.mxu0
    %v969 = vadd.f32 0.0, %v968
    %v970 = vpop.f32.mrf.mxu0
    %v971 = vadd.f32 0.0, %v970
    %972 = vmatprep.mubr.bf16.mxu0 0
    %973 = vmatmul.mubr.bf16.gmra.mxu0 %v219
    %v974 = vpop.f32.mrf.mxu0
    %v975 = vadd.f32 0.0, %v974
    %v976 = vpop.f32.mrf.mxu0
    %v977 = vadd.f32 0.0, %v976
    %v978 = vpop.f32.mrf.mxu0
    %v979 = vadd.f32 0.0, %v978
    %v980 = vpop.f32.mrf.mxu0
    %v981 = vadd.f32 0.0, %v980
    %982 = vmatprep.mubr.bf16.mxu0 0
    %983 = vmatmul.mubr.bf16.gmra.mxu0 %v222
    %v984 = vpop.f32.mrf.mxu0
    %v985 = vadd.f32 0.0, %v984
    %v986 = vpop.f32.mrf.mxu0
    %v987 = vadd.f32 0.0, %v986
    %v988 = vpop.f32.mrf.mxu0
    %v989 = vadd.f32 0.0, %v988
    %v990 = vpop.f32.mrf.mxu0
    %v991 = vadd.f32 0.0, %v990
    %992 = vdwg.mxu0
    %s993 = scalar_lea.vmem [#allocation2], 896
    %994 = vst [vmem:[%s993] sm:$0xff] %v855
    %995 = vst.msk [vmem:[%s993 + $0x8] sm:$0xff] %vm398, %v857
    %996 = vst [vmem:[%s993 + $0x10] sm:$0xff] %v859
    %997 = vst.msk [vmem:[%s993 + $0x18] sm:$0xff] %vm398, %v861
    %998 = vst [vmem:[%s993 + $0x20] sm:$0xff] %v865
    %999 = vst.msk [vmem:[%s993 + $0x28] sm:$0xff] %vm398, %v867
    %1000 = vst [vmem:[%s993 + $0x30] sm:$0xff] %v869
    %1001 = vst.msk [vmem:[%s993 + $0x38] sm:$0xff] %vm398, %v871
    %1002 = vst [vmem:[%s993 + $0x40] sm:$0xff] %v875
    %1003 = vst.msk [vmem:[%s993 + $0x48] sm:$0xff] %vm398, %v877
    %1004 = vst [vmem:[%s993 + $0x50] sm:$0xff] %v879
    %1005 = vst.msk [vmem:[%s993 + $0x58] sm:$0xff] %vm398, %v881
    %1006 = vst [vmem:[%s993 + $0x60] sm:$0xff] %v885
    %1007 = vst.msk [vmem:[%s993 + $0x68] sm:$0xff] %vm398, %v887
    %1008 = vst [vmem:[%s993 + $0x70] sm:$0xff] %v889
    %1009 = vst.msk [vmem:[%s993 + $0x78] sm:$0xff] %vm398, %v891
    %1010 = vst [vmem:[%s993 + $0x80] sm:$0xff] %v895
    %1011 = vst.msk [vmem:[%s993 + $0x88] sm:$0xff] %vm398, %v897
    %1012 = vst [vmem:[%s993 + $0x90] sm:$0xff] %v899
    %1013 = vst.msk [vmem:[%s993 + $0x98] sm:$0xff] %vm398, %v901
    %1014 = vst [vmem:[%s993 + $0xa0] sm:$0xff] %v905
    %1015 = vst.msk [vmem:[%s993 + $0xa8] sm:$0xff] %vm398, %v907
    %1016 = vst [vmem:[%s993 + $0xb0] sm:$0xff] %v909
    %1017 = vst.msk [vmem:[%s993 + $0xb8] sm:$0xff] %vm398, %v911
    %1018 = vst [vmem:[%s993 + $0xc0] sm:$0xff] %v915
    %1019 = vst.msk [vmem:[%s993 + $0xc8] sm:$0xff] %vm398, %v917
    %1020 = vst [vmem:[%s993 + $0xd0] sm:$0xff] %v919
    %1021 = vst.msk [vmem:[%s993 + $0xd8] sm:$0xff] %vm398, %v921
    %1022 = vst [vmem:[%s993 + $0xe0] sm:$0xff] %v925
    %1023 = vst.msk [vmem:[%s993 + $0xe8] sm:$0xff] %vm398, %v927
    %1024 = vst [vmem:[%s993 + $0xf0] sm:$0xff] %v929
    %1025 = vst.msk [vmem:[%s993 + $0xf8] sm:$0xff] %vm398, %v931
    %1026 = vst [vmem:[%s993 + $0x100] sm:$0xff] %v935
    %1027 = vst.msk [vmem:[%s993 + $0x108] sm:$0xff] %vm398, %v937
    %1028 = vst [vmem:[%s993 + $0x110] sm:$0xff] %v939
    %1029 = vst.msk [vmem:[%s993 + $0x118] sm:$0xff] %vm398, %v941
    %1030 = vst [vmem:[%s993 + $0x120] sm:$0xff] %v945
    %1031 = vst.msk [vmem:[%s993 + $0x128] sm:$0xff] %vm398, %v947
    %1032 = vst [vmem:[%s993 + $0x130] sm:$0xff] %v949
    %1033 = vst.msk [vmem:[%s993 + $0x138] sm:$0xff] %vm398, %v951
    %1034 = vst [vmem:[%s993 + $0x140] sm:$0xff] %v955
    %1035 = vst.msk [vmem:[%s993 + $0x148] sm:$0xff] %vm398, %v957
    %1036 = vst [vmem:[%s993 + $0x150] sm:$0xff] %v959
    %1037 = vst.msk [vmem:[%s993 + $0x158] sm:$0xff] %vm398, %v961
    %1038 = vst [vmem:[%s993 + $0x160] sm:$0xff] %v965
    %1039 = vst.msk [vmem:[%s993 + $0x168] sm:$0xff] %vm398, %v967
    %1040 = vst [vmem:[%s993 + $0x170] sm:$0xff] %v969
    %1041 = vst.msk [vmem:[%s993 + $0x178] sm:$0xff] %vm398, %v971
    %1042 = vst [vmem:[%s993 + $0x180] sm:$0xff] %v975
    %1043 = vst.msk [vmem:[%s993 + $0x188] sm:$0xff] %vm398, %v977
    %1044 = vst [vmem:[%s993 + $0x190] sm:$0xff] %v979
    %1045 = vst.msk [vmem:[%s993 + $0x198] sm:$0xff] %vm398, %v981
    %1046 = vst [vmem:[%s993 + $0x1a0] sm:$0xff] %v985
    %1047 = vst.msk [vmem:[%s993 + $0x1a8] sm:$0xff] %vm398, %v987
    %1048 = vst [vmem:[%s993 + $0x1b0] sm:$0xff] %v989
    %1049 = vst.msk [vmem:[%s993 + $0x1b8] sm:$0xff] %vm398, %v991
    // Predicated region
    $region14: #{tpu_custom_call.1} parent=1 // pred_check
      _
    $region15: #{tpu_custom_call.1} parent=1 // pred_check_branch
      %1051 = sbr.rel (0) target = $region17
    $region16: #{tpu_custom_call.1} parent=1 // pred_region
      %s1053 = ssub.s32 21504, 21504
      %1054 = vsyncadd [#allocation3], %s1053
      %s1055 = sshll.u32 [#allocation2], 4
      %s1056 = int_to_ptr.vmem [resolvable:$true] %s1055
      %1061 = dma.vmem_to_hbm [thread:$0]  %s1056, 21504, %s3, [#allocation3], 256, 256, 16
    $region17: #{tpu_custom_call.1} parent=1 // pred_fallthru
      _
    // Predicated region
    $region18: #{tpu_custom_call.1} parent=1 // pred_check
      _
    $region19: #{tpu_custom_call.1} parent=1 // pred_check_branch
      %1063 = sbr.rel (0) target = $region21
    $region20: #{tpu_custom_call.1} parent=1 // pred_region
      %1064 = dma.done [#allocation3], 21504
    $region21: #{tpu_custom_call.1} parent=1 // pred_fallthru
      _
    %1065 = vsyncpa [#allocation3], 1

</llo_original>
